<compile_context>
chip_gen: v5e
topology: v5e:2x2
jax: 0.10.0
libtpu: 0.0.40
codegen_flags: <defaults>
</compile_context>

<pallas_src>
import jax
import jax.numpy as jnp
from jax.experimental import pallas as pl
from jax.experimental.pallas import tpu as pltpu


def _round_up(x, m):
    return ((x + m - 1) // m) * m


def _pick_tile(n, preferred):
    """Largest multiple of 128 <= preferred that divides n.  The wrapper pads
    n to a multiple of 128, so this always succeeds with >= 128; the bare-n
    fallback only triggers for (exempt) full-extent blocks."""
    t = (min(preferred, n) // 128) * 128
    while t >= 128:
        if n % t == 0:
            return t
        t -= 128
    return n


def _vmem_ceiling():
    """Half of physical VMEM: 64 MiB on 128-MiB parts (v5e/v6e), 32 MiB on
    v7x.  Conservative 32 MiB fallback works on every generation."""
    try:
        cap = pltpu.get_tpu_info().vmem_capacity_bytes
        return int(min(cap // 2, 64 << 20))
    except Exception:
        return 32 << 20


def _interaction_kernel(uf_ref, itf_ref, s_ref):
    """s[0, t] = sum_d user[t, d] * item[t, d]; features streamed exactly once
    and the result written lane-dense as a (1, ts) row."""
    prod = uf_ref[...].astype(jnp.float32) * itf_ref[...].astype(jnp.float32)
    s_ref[...] = jnp.transpose(jnp.sum(prod, axis=1, keepdims=True))


def _matvec_kernel(s_ref, w_ref, bias_ref, out_ref, acc_ref):
    """Grid step (j = W row tile, k = reduction tile over s / W columns).

    acc[0, :] += s_row(1, tk) . W_tile(tj, tk)^T   (lane-dense MXU matvec,
    f32 accumulation via preferred_element_type).
    """
    k = pl.program_id(1)

    @pl.when(k == 0)
    def _init():
        acc_ref[...] = jnp.zeros_like(acc_ref)

    acc_ref[...] += jax.lax.dot_general(
        s_ref[...].astype(w_ref.dtype),   # bf16 at the MXU only if W is bf16
        w_ref[...],
        dimension_numbers=(((1,), (1,)), ((), ())),
        preferred_element_type=jnp.float32)

    @pl.when(k == pl.num_programs(1) - 1)
    def _finalize():
        out_ref[...] = (acc_ref[...] + bias_ref[...]).astype(out_ref.dtype)


def fully_connected_forward(user_indices, item_indices, user_features,
                            item_features, item_bias, user_bias,
                            fc_w, fc_b, global_bias, *,
                            weight_stream_dtype=None):
    """Mirrors FullyConnectedModel.forward (indices are unused there too).

    weight_stream_dtype: dtype fc_w is streamed from HBM in.  jnp.bfloat16
    halves the dominant HBM traffic of this bandwidth-bound matvec (~2x on
    every generation) at ~3 significant digits on W; None keeps the incoming
    (f32) dtype for bit-faithful Linear semantics.
    """
    # TODO(synk): the PyTorch forward mutates the module (rebuilds self.fc as
    # Linear(B, B) when dims mismatch); only the resulting math is implemented
    # here, with the (B, B) weights passed in explicitly.
    del user_indices, item_indices  # unused by the PyTorch forward as well
    B, D = user_features.shape

    # ---- wrapper-side folding / padding (O(B) except the optional W pad) ----
    bias_row = (fc_b.reshape(-1) + item_bias.reshape(-1) + user_bias.reshape(-1)
                + global_bias.reshape(-1)[0]).reshape(1, B).astype(jnp.float32)

    w = fc_w if weight_stream_dtype is None else fc_w.astype(weight_stream_dtype)

    Bp = B if B % 128 == 0 else _round_up(B, 128)
    pad = Bp - B
    if pad:
        # Zero padding is exact: padded s entries are 0 and padded W rows/cols
        # are 0, so the first B outputs are unchanged; padded outputs are
        # sliced off below.
        user_features = jnp.pad(user_features, ((0, pad), (0, 0)))
        item_features = jnp.pad(item_features, ((0, pad), (0, 0)))
        w = jnp.pad(w, ((0, pad), (0, pad)))
        bias_row = jnp.pad(bias_row, ((0, 0), (0, pad)))

    vmem_cap = _vmem_ceiling()
    w_bytes = jnp.dtype(w.dtype).itemsize

    # ---- kernel 1: interaction row s (features streamed exactly once) -------
    rows_budget = max(128, (8 << 20) // (16 * max(D, 1)))  # ~8 MiB feature tiles
    ts = _pick_tile(Bp, min(1024, rows_budget))
    s_step = 4 * (2 * 2 * ts * D + 2 * ts)
    s_row = pl.pallas_call(
        _interaction_kernel,
        out_shape=jax.ShapeDtypeStruct((1, Bp), jnp.float32),
        grid_spec=pltpu.PrefetchScalarGridSpec(
            num_scalar_prefetch=0,
            grid=(Bp // ts,),
            in_specs=[pl.BlockSpec((ts, D), lambda i: (i, 0)),
                      pl.BlockSpec((ts, D), lambda i: (i, 0))],
            out_specs=pl.BlockSpec((1, ts), lambda i: (0, i))),
        compiler_params=pltpu.CompilerParams(
            dimension_semantics=("parallel",),
            vmem_limit_bytes=int(min(max(2 * s_step, 8 << 20), vmem_cap))),
        cost_estimate=pl.CostEstimate(
            flops=2 * Bp * D, transcendentals=0,
            bytes_accessed=4 * (2 * Bp * D + Bp)),
    )(user_features, item_features)

    # ---- kernel 2: HBM-roofline W-streaming matvec + fused bias row ---------
    tj = _pick_tile(Bp, min(1024, max(Bp // 2, 128)))  # >=2 j-tiles when possible
    tk = _pick_tile(Bp, 1024)                          # ~2-4 MB W tile per step
    m_step = 2 * (tj * tk * w_bytes + 4 * tk + 4 * tj) + 3 * 4 * tj
    out = pl.pallas_call(
        _matvec_kernel,
        out_shape=jax.ShapeDtypeStruct((1, Bp), jnp.float32),
        grid_spec=pltpu.PrefetchScalarGridSpec(
            num_scalar_prefetch=0,
            grid=(Bp // tj, Bp // tk),
            in_specs=[
                pl.BlockSpec((1, tk), lambda j, k: (0, k)),    # s row (tiny)
                # TODO(synk): add pipeline_mode=pl.Buffered(3) on the W stream
                # if a bundle dump still shows exposed DMA waits after the
                # tile bump.
                pl.BlockSpec((tj, tk), lambda j, k: (j, k)),   # W tile (dominant)
                pl.BlockSpec((1, tj), lambda j, k: (0, j)),    # folded bias row
            ],
            out_specs=pl.BlockSpec((1, tj), lambda j, k: (0, j)),
            scratch_shapes=[pltpu.VMEM((1, tj), jnp.float32)]),
        compiler_params=pltpu.CompilerParams(
            dimension_semantics=("parallel", "arbitrary"),
            vmem_limit_bytes=int(min(max(2 * m_step, 8 << 20), vmem_cap))),
        cost_estimate=pl.CostEstimate(
            flops=2 * Bp * Bp + 2 * Bp, transcendentals=0,
            bytes_accessed=w_bytes * Bp * Bp
                           + 4 * (Bp * (Bp // tj) + 3 * Bp)),
    )(s_row, w, bias_row)

    return out[0, :B]  # .squeeze() -> (B,)


if __name__ == "__main__":
    B, D = 8, 32  # batch, feature dim (input_dim = D != 1 -> fc becomes Linear(B, B))

    key = jax.random.PRNGKey(0)
    k_uf, k_if, k_w, k_b, k_ib, k_ub = jax.random.split(key, 6)

    user_indices = jnp.arange(B, dtype=jnp.int32)
    item_indices = jnp.arange(B, dtype=jnp.int32)
    user_features = jax.random.normal(k_uf, (B, D), dtype=jnp.float32)
    item_features = jax.random.normal(k_if, (B, D), dtype=jnp.float32)
    item_bias = jax.random.normal(k_ib, (B, 1), dtype=jnp.float32) * 0.1
    user_bias = jax.random.normal(k_ub, (B, 1), dtype=jnp.float32) * 0.1

    # nn.Linear(B, B) default init: U(-1/sqrt(in), 1/sqrt(in)); global_bias = 0.
    bound = float(B) ** -0.5
    fc_w = jax.random.uniform(k_w, (B, B), jnp.float32, -bound, bound)
    fc_b = jax.random.uniform(k_b, (B,), jnp.float32, -bound, bound)
    global_bias = jnp.zeros((1,), dtype=jnp.float32)

    # Exact f32 path (module semantics).
    pred_f32 = fully_connected_forward(
        user_indices, item_indices, user_features, item_features,
        item_bias, user_bias, fc_w, fc_b, global_bias,
        weight_stream_dtype=None)
    # Bandwidth-optimized path: fc_w streamed in bf16, f32 accumulation.
    pred_bf16 = fully_connected_forward(
        user_indices, item_indices, user_features, item_features,
        item_bias, user_bias, fc_w, fc_b, global_bias,
        weight_stream_dtype=jnp.bfloat16)
    jax.block_until_ready((pred_f32, pred_bf16))

    # Pure-JAX references.
    s_ref = jnp.sum(user_features * item_features, axis=1)
    extra = fc_b + global_bias[0] + item_bias[:, 0] + user_bias[:, 0]
    ref_f32 = fc_w @ s_ref + extra
    w_q = fc_w.astype(jnp.bfloat16).astype(jnp.float32)
    s_q = s_ref.astype(jnp.bfloat16).astype(jnp.float32)
    ref_bf16 = jnp.sum(w_q * s_q[None, :], axis=1) + extra

    assert pred_f32.shape == (B,) and pred_bf16.shape == (B,)
    err_f32 = float(jnp.max(jnp.abs(pred_f32 - ref_f32)))
    assert jnp.allclose(pred_f32, ref_f32, atol=1e-4, rtol=1e-4), \
        f"f32 path max abs err {err_f32}"
    err_bf16 = float(jnp.max(jnp.abs(pred_bf16 - ref_bf16)))
    assert jnp.allclose(pred_bf16, ref_bf16, atol=1e-2, rtol=1e-2), \
        f"bf16 path max abs err {err_bf16}"

    print("KERNEL_OK")
</pallas_src>

<mosaic_0001>
module attributes {stable_mosaic.version = 11 : i64} {
  func.func @_interaction_kernel(%arg0: i32, %arg1: memref<128x32xf32, #tpu.memory_space<vmem>>, %arg2: memref<128x32xf32, #tpu.memory_space<vmem>>, %arg3: memref<1x128xf32, #tpu.memory_space<vmem>>) attributes {dimension_semantics = [#tpu.dimension_semantics<parallel>], iteration_bounds = array<i64: 1>, scalar_prefetch = 0 : i64, scratch_operands = 0 : i64, tpu.core_type = #tpu.core_type<tc>, window_params = [{transform_indices = @transform_0, window_bounds = array<i64: 128, 32>}, {transform_indices = @transform_1, window_bounds = array<i64: 128, 32>}, {transform_indices = @transform_2, window_bounds = array<i64: 1, 128>}]} {
    %c0 = arith.constant 0 : index
    %c0_0 = arith.constant 0 : index
    %0 = vector.load %arg1[%c0, %c0_0] : memref<128x32xf32, #tpu.memory_space<vmem>>, vector<128x32xf32>
    %c0_1 = arith.constant 0 : index
    %c0_2 = arith.constant 0 : index
    %1 = vector.load %arg2[%c0_1, %c0_2] : memref<128x32xf32, #tpu.memory_space<vmem>>, vector<128x32xf32>
    %2 = arith.mulf %0, %1 : vector<128x32xf32>
    %cst = arith.constant dense<0.000000e+00> : vector<128xf32>
    %3 = vector.multi_reduction <add>, %2, %cst [1] : vector<128x32xf32> to vector<128xf32>
    %4 = vector.shape_cast %3 : vector<128xf32> to vector<128x1xf32>
    %5 = tpu.transpose %4, [1, 0] : vector<128x1xf32> -> vector<1x128xf32>
    %c0_3 = arith.constant 0 : index
    %c0_4 = arith.constant 0 : index
    %6 = vector.load %arg3[%c0_3, %c0_4] : memref<1x128xf32, #tpu.memory_space<vmem>>, vector<1x128xf32>
    tpu.vector_store %arg3[%c0_3, %c0_4], %5 {strides = array<i32>} : memref<1x128xf32, #tpu.memory_space<vmem>>, vector<1x128xf32>,
    return
  }
  func.func @transform_0(%arg0: i32) -> (i32, i32) {
    %c0_i32 = arith.constant 0 : i32
    %c0_i32_0 = arith.constant 0 : i32
    return %arg0, %c0_i32 : i32, i32
  }
  func.func @transform_1(%arg0: i32) -> (i32, i32) {
    %c0_i32 = arith.constant 0 : i32
    %c0_i32_0 = arith.constant 0 : i32
    return %arg0, %c0_i32 : i32, i32
  }
  func.func @transform_2(%arg0: i32) -> (i32, i32) {
    %c0_i32 = arith.constant 0 : i32
    %c0_i32_0 = arith.constant 0 : i32
    return %c0_i32, %arg0 : i32, i32
  }
}

</mosaic_0001>

<llo_original>
// kernel: tpu_custom_call.1
$region0: #{tpu_custom_call.1}
  #allocation0 [shape = 'u32[]', space=smem, size = 0x4, offset = 0x4, fixed_abs, tag = 'smem constant byte address 0x4 - core index']
  #allocation1 [shape = 'u32[72,128]{1,0:T(1,128)}', space=vmem, size = 0x9000, scoped, tag = 'internal scratch']
  %s0 = inlined_call_operand.vmem [shape: f32[128,32], index: 0, kind: input, shape index: {}]
  %s1 = inlined_call_operand.vmem [shape: f32[128,32], index: 1, kind: input, shape index: {}]
  %s2 = inlined_call_operand.hbm [shape: f32[1,128], index: 2, kind: output, shape index: {}]
  %s3 = sld [smem:[#allocation0]]
  $region18: #{tpu_custom_call.1} parent=0
    _
  %s5 = ssub.s32 1, %s3
  %s6 = scalar_select 0, %s5, %s3
  $region1: #{tpu_custom_call.1} parent=0
    #allocation2 [shape = 'u8[512]{0}', space=vmem, size = 0x400, scoped, tag = 'output window, operand 0, single buffered']
    #allocation3 [shape = 's32[1]{0}', space=sflag, size = 0x4, scoped, tag = 'scoped memory for tpu_custom_call.1']
    %7 = vsyncpa [#allocation3], 0
    // Predicated region
    $region2: #{tpu_custom_call.1} parent=1 // pred_check
      _
    $region3: #{tpu_custom_call.1} parent=1 // pred_check_branch
      %9 = sbr.rel (0) target = $region5
    $region4: #{tpu_custom_call.1} parent=1 // pred_region
      _
    $region5: #{tpu_custom_call.1} parent=1 // pred_fallthru
      _
    // Predicated region
    $region6: #{tpu_custom_call.1} parent=1 // pred_check
      _
    $region7: #{tpu_custom_call.1} parent=1 // pred_check_branch
      %11 = sbr.rel (0) target = $region9
    $region8: #{tpu_custom_call.1} parent=1 // pred_region
      _
    $region9: #{tpu_custom_call.1} parent=1 // pred_fallthru
      _
    %v12 = vld [vmem:[%s0] sm:$0xff]
    %v13 = vld [vmem:[%s0 + $0x8] sm:$0xff]
    %v14 = vld [vmem:[%s0 + $0x10] sm:$0xff]
    %v15 = vld [vmem:[%s0 + $0x18] sm:$0xff]
    %v16 = vld [vmem:[%s0 + $0x20] sm:$0xff]
    %v17 = vld [vmem:[%s0 + $0x28] sm:$0xff]
    %v18 = vld [vmem:[%s0 + $0x30] sm:$0xff]
    %v19 = vld [vmem:[%s0 + $0x38] sm:$0xff]
    %v20 = vld [vmem:[%s0 + $0x40] sm:$0xff]
    %v21 = vld [vmem:[%s0 + $0x48] sm:$0xff]
    %v22 = vld [vmem:[%s0 + $0x50] sm:$0xff]
    %v23 = vld [vmem:[%s0 + $0x58] sm:$0xff]
    %v24 = vld [vmem:[%s0 + $0x60] sm:$0xff]
    %v25 = vld [vmem:[%s0 + $0x68] sm:$0xff]
    %v26 = vld [vmem:[%s0 + $0x70] sm:$0xff]
    %v27 = vld [vmem:[%s0 + $0x78] sm:$0xff]
    %v28 = vld [vmem:[%s1] sm:$0xff]
    %v29 = vld [vmem:[%s1 + $0x8] sm:$0xff]
    %v30 = vld [vmem:[%s1 + $0x10] sm:$0xff]
    %v31 = vld [vmem:[%s1 + $0x18] sm:$0xff]
    %v32 = vld [vmem:[%s1 + $0x20] sm:$0xff]
    %v33 = vld [vmem:[%s1 + $0x28] sm:$0xff]
    %v34 = vld [vmem:[%s1 + $0x30] sm:$0xff]
    %v35 = vld [vmem:[%s1 + $0x38] sm:$0xff]
    %v36 = vld [vmem:[%s1 + $0x40] sm:$0xff]
    %v37 = vld [vmem:[%s1 + $0x48] sm:$0xff]
    %v38 = vld [vmem:[%s1 + $0x50] sm:$0xff]
    %v39 = vld [vmem:[%s1 + $0x58] sm:$0xff]
    %v40 = vld [vmem:[%s1 + $0x60] sm:$0xff]
    %v41 = vld [vmem:[%s1 + $0x68] sm:$0xff]
    %v42 = vld [vmem:[%s1 + $0x70] sm:$0xff]
    %v43 = vld [vmem:[%s1 + $0x78] sm:$0xff]
    %v44 = vmul.f32 %v12, %v28
    %v45 = vmul.f32 %v13, %v29
    %v46 = vmul.f32 %v14, %v30
    %v47 = vmul.f32 %v15, %v31
    %v48 = vmul.f32 %v16, %v32
    %v49 = vmul.f32 %v17, %v33
    %v50 = vmul.f32 %v18, %v34
    %v51 = vmul.f32 %v19, %v35
    %v52 = vmul.f32 %v20, %v36
    %v53 = vmul.f32 %v21, %v37
    %v54 = vmul.f32 %v22, %v38
    %v55 = vmul.f32 %v23, %v39
    %v56 = vmul.f32 %v24, %v40
    %v57 = vmul.f32 %v25, %v41
    %v58 = vmul.f32 %v26, %v42
    %v59 = vmul.f32 %v27, %v43
    %vm60 = vcmask 261120
    %v61 = vsel %vm60, %v44, 0.0
    %62 = vadd.xlane.f32.xlu0 %v61
    %v63 = vpop.xlane.xlu0 %62
    %v64 = vsel %vm60, %v45, 0.0
    %65 = vadd.xlane.f32.xlu0 %v64
    %v66 = vpop.xlane.xlu0 %65
    %v67 = vsel %vm60, %v46, 0.0
    %68 = vadd.xlane.f32.xlu0 %v67
    %v69 = vpop.xlane.xlu0 %68
    %v70 = vsel %vm60, %v47, 0.0
    %71 = vadd.xlane.f32.xlu0 %v70
    %v72 = vpop.xlane.xlu0 %71
    %v73 = vsel %vm60, %v48, 0.0
    %74 = vadd.xlane.f32.xlu0 %v73
    %v75 = vpop.xlane.xlu0 %74
    %v76 = vsel %vm60, %v49, 0.0
    %77 = vadd.xlane.f32.xlu0 %v76
    %v78 = vpop.xlane.xlu0 %77
    %v79 = vsel %vm60, %v50, 0.0
    %80 = vadd.xlane.f32.xlu0 %v79
    %v81 = vpop.xlane.xlu0 %80
    %v82 = vsel %vm60, %v51, 0.0
    %83 = vadd.xlane.f32.xlu0 %v82
    %v84 = vpop.xlane.xlu0 %83
    %v85 = vsel %vm60, %v52, 0.0
    %86 = vadd.xlane.f32.xlu0 %v85
    %v87 = vpop.xlane.xlu0 %86
    %v88 = vsel %vm60, %v53, 0.0
    %89 = vadd.xlane.f32.xlu0 %v88
    %v90 = vpop.xlane.xlu0 %89
    %v91 = vsel %vm60, %v54, 0.0
    %92 = vadd.xlane.f32.xlu0 %v91
    %v93 = vpop.xlane.xlu0 %92
    %v94 = vsel %vm60, %v55, 0.0
    %95 = vadd.xlane.f32.xlu0 %v94
    %v96 = vpop.xlane.xlu0 %95
    %v97 = vsel %vm60, %v56, 0.0
    %98 = vadd.xlane.f32.xlu0 %v97
    %v99 = vpop.xlane.xlu0 %98
    %v100 = vsel %vm60, %v57, 0.0
    %101 = vadd.xlane.f32.xlu0 %v100
    %v102 = vpop.xlane.xlu0 %101
    %v103 = vsel %vm60, %v58, 0.0
    %104 = vadd.xlane.f32.xlu0 %v103
    %v105 = vpop.xlane.xlu0 %104
    %v106 = vsel %vm60, %v59, 0.0
    %107 = vadd.xlane.f32.xlu0 %v106
    %v108 = vpop.xlane.xlu0 %107
    %109 = vxpose.xlu0.b32.start [1/16] %v63, 128
    %110 = vxpose.xlu0.b32.cont [2/16] %v66, 128
    %111 = vxpose.xlu0.b32.cont [3/16] %v69, 128
    %112 = vxpose.xlu0.b32.cont [4/16] %v72, 128
    %113 = vxpose.xlu0.b32.cont [5/16] %v75, 128
    %114 = vxpose.xlu0.b32.cont [6/16] %v78, 128
    %115 = vxpose.xlu0.b32.cont [7/16] %v81, 128
    %116 = vxpose.xlu0.b32.cont [8/16] %v84, 128
    %117 = vxpose.xlu0.b32.cont [9/16] %v87, 128
    %118 = vxpose.xlu0.b32.cont [10/16] %v90, 128
    %119 = vxpose.xlu0.b32.cont [11/16] %v93, 128
    %120 = vxpose.xlu0.b32.cont [12/16] %v96, 128
    %121 = vxpose.xlu0.b32.cont [13/16] %v99, 128
    %122 = vxpose.xlu0.b32.cont [14/16] %v102, 128
    %123 = vxpose.xlu0.b32.cont [15/16] %v105, 128
    %124 = vxpose.xlu0.b32.end [16/16] %v108, 128
    %v125 = vpop.trf.xlu0
    %v126 = vpop.trf.xlu0
    %v127 = vpop.trf.xlu0
    %v128 = vpop.trf.xlu0
    %v129 = vpop.trf.xlu0
    %v130 = vpop.trf.xlu0
    %v131 = vpop.trf.xlu0
    %v132 = vpop.trf.xlu0
    %v133 = vpop.trf.xlu0
    %v134 = vpop.trf.xlu0
    %v135 = vpop.trf.xlu0
    %v136 = vpop.trf.xlu0
    %v137 = vpop.trf.xlu0
    %v138 = vpop.trf.xlu0
    %v139 = vpop.trf.xlu0
    %v140 = vpop.trf.xlu0
    %141 = vst [vmem:[#allocation2] sm:$0x1] %v125
    // Predicated region
    $region10: #{tpu_custom_call.1} parent=1 // pred_check
      _
    $region11: #{tpu_custom_call.1} parent=1 // pred_check_branch
      %143 = sbr.rel (0) target = $region13
    $region12: #{tpu_custom_call.1} parent=1 // pred_region
      %145 = vsyncadd [#allocation3], 0
      %s147 = sshll.u32 [#allocation2], 4
      %s148 = int_to_ptr.vmem [resolvable:$true] %s147
      %s149 = sshll.u32 %s2, 4
      %s150 = int_to_ptr.hbm [resolvable:$true] %s149
      %152 = dma.vmem_to_hbm [thread:$0]  %s148, 16, %s150, [#allocation3]
    $region13: #{tpu_custom_call.1} parent=1 // pred_fallthru
      _
    // Predicated region
    $region14: #{tpu_custom_call.1} parent=1 // pred_check
      _
    $region15: #{tpu_custom_call.1} parent=1 // pred_check_branch
      %154 = sbr.rel (0) target = $region17
    $region16: #{tpu_custom_call.1} parent=1 // pred_region
      %156 = dma.done [#allocation3], 16
    $region17: #{tpu_custom_call.1} parent=1 // pred_fallthru
      _
    %157 = vsyncpa [#allocation3], 1

</llo_original>
